<compile_context>
chip_gen: v6e
topology: v6e:2x2x1
jax: 0.10.0
libtpu: 0.0.40
codegen_flags: <defaults>
</compile_context>

<pallas_src>
import jax
import jax.numpy as jnp
from jax.experimental import pallas as pl
from jax.experimental.pallas import tpu as pltpu


def se_block_kernel(x_ref, w1_ref, b1_ref, alpha_ref, w2_ref, b2_ref, o_ref):
    # x_ref: (1, C, HW) in the input dtype; all internal math in f32.
    x = x_ref[...]
    x_f32 = x.astype(jnp.float32)

    # ---- squeeze: global average pool over spatial dims ---------------------
    y = jnp.mean(x_f32, axis=-1)                                  # (1, C)

    # ---- excitation: fc1 -> PReLU -> fc2 -> sigmoid --------------------------
    h = jnp.dot(y, w1_ref[...],
                preferred_element_type=jnp.float32) + b1_ref[...]  # (1, hid)
    alpha = alpha_ref[0, 0]
    h = jnp.where(h >= 0.0, h, alpha * h)                          # PReLU (single param)

    z = jnp.dot(h, w2_ref[...],
                preferred_element_type=jnp.float32) + b2_ref[...]  # (1, C)
    s = jax.nn.sigmoid(z)                                          # (1, C)

    # ---- scale: broadcast channel gates over spatial dims --------------------
    o_ref[...] = (x_f32 * s[:, :, None]).astype(o_ref.dtype)


def se_block(x, w1, b1, alpha, w2, b2):
    """x: (B, C, H, W).  w1: (hid, C), b1: (hid,), w2: (C, hid), b2: (C,)
    exactly like the PyTorch nn.Linear parameters; alpha: PReLU scalar."""
    B, C, H, W = x.shape
    HW = H * W
    hid = w1.shape[0]
    x2 = x.reshape(B, C, HW)

    # nn.Linear computes y @ W^T + b, so pre-transpose the weights.
    w1_t = jnp.transpose(w1).astype(jnp.float32)        # (C, hid)
    w2_t = jnp.transpose(w2).astype(jnp.float32)        # (hid, C)
    b1_2d = b1.reshape(1, hid).astype(jnp.float32)
    b2_2d = b2.reshape(1, C).astype(jnp.float32)
    alpha_2d = jnp.asarray(alpha, jnp.float32).reshape(1, 1)

    # VMEM budget: double-buffered input + output block, plus resident weights,
    # plus a little headroom.  Cap at 64 MiB so the same sizing works on v7x.
    itemsize = jnp.dtype(x.dtype).itemsize
    block_bytes = C * HW * itemsize
    weight_bytes = 4 * (2 * C * hid + hid + C + 2)
    vmem_limit = int(min(64 * 1024 * 1024,
                         4 * block_bytes + 2 * weight_bytes + (2 << 20)))

    grid_spec = pltpu.PrefetchScalarGridSpec(
        num_scalar_prefetch=0,
        grid=(B,),
        in_specs=[
            # x: one image per grid step, streamed & pipelined.
            pl.BlockSpec((1, C, HW), lambda b: (b, 0, 0)),
            # weights / biases: constant block index -> stay resident in VMEM.
            pl.BlockSpec((C, hid), lambda b: (0, 0)),                 # w1_t
            pl.BlockSpec((1, hid), lambda b: (0, 0)),                 # b1
            pl.BlockSpec(memory_space=pltpu.MemorySpace.SMEM),        # alpha
            pl.BlockSpec((hid, C), lambda b: (0, 0)),                 # w2_t
            pl.BlockSpec((1, C), lambda b: (0, 0)),                   # b2
        ],
        out_specs=pl.BlockSpec((1, C, HW), lambda b: (b, 0, 0)),
    )

    out = pl.pallas_call(
        se_block_kernel,
        out_shape=jax.ShapeDtypeStruct((B, C, HW), x.dtype),
        grid_spec=grid_spec,
        compiler_params=pltpu.CompilerParams(
            dimension_semantics=("parallel",),
            vmem_limit_bytes=vmem_limit,
        ),
    )(x2, w1_t, b1_2d, alpha_2d, w2_t, b2_2d)

    return out.reshape(B, C, H, W)


def se_block_ref(x, w1, b1, alpha, w2, b2):
    """Pure-JAX reference matching the PyTorch forward."""
    y = jnp.mean(x.astype(jnp.float32), axis=(2, 3))   # avg_pool -> (B, C)
    h = y @ w1.T + b1
    h = jnp.where(h >= 0.0, h, alpha * h)              # PReLU
    s = jax.nn.sigmoid(h @ w2.T + b2)
    return (x.astype(jnp.float32) * s[:, :, None, None]).astype(x.dtype)


if __name__ == "__main__":
    key = jax.random.PRNGKey(0)
    B, C, H, W = 2, 64, 16, 16
    reduction = 16
    hid = C // reduction

    k_x, k_w1, k_b1, k_w2, k_b2 = jax.random.split(key, 5)
    x = jax.random.normal(k_x, (B, C, H, W), dtype=jnp.float32)

    # Deterministic parameter init (shapes match the PyTorch module's __init__).
    w1 = jax.random.normal(k_w1, (hid, C), dtype=jnp.float32) * 0.1
    b1 = jax.random.normal(k_b1, (hid,), dtype=jnp.float32) * 0.1
    w2 = jax.random.normal(k_w2, (C, hid), dtype=jnp.float32) * 0.1
    b2 = jax.random.normal(k_b2, (C,), dtype=jnp.float32) * 0.1
    alpha = jnp.float32(0.25)                          # nn.PReLU() default init

    out = se_block(x, w1, b1, alpha, w2, b2)
    jax.block_until_ready(out)

    ref = se_block_ref(x, w1, b1, alpha, w2, b2)
    assert out.shape == (B, C, H, W)
    assert jnp.allclose(out, ref, atol=1e-5, rtol=1e-5), "mismatch vs reference"

    print("KERNEL_OK")
</pallas_src>

<mosaic_0001>
module attributes {stable_mosaic.version = 11 : i64} {
  func.func @se_block_kernel(%arg0: i32, %arg1: memref<1x64x256xf32, #tpu.memory_space<vmem>>, %arg2: memref<64x4xf32, #tpu.memory_space<vmem>>, %arg3: memref<1x4xf32, #tpu.memory_space<vmem>>, %arg4: memref<1x1xf32, #tpu.memory_space<smem>>, %arg5: memref<4x64xf32, #tpu.memory_space<vmem>>, %arg6: memref<1x64xf32, #tpu.memory_space<vmem>>, %arg7: memref<1x64x256xf32, #tpu.memory_space<vmem>>) attributes {dimension_semantics = [#tpu.dimension_semantics<parallel>], iteration_bounds = array<i64: 2>, scalar_prefetch = 0 : i64, scratch_operands = 0 : i64, tpu.core_type = #tpu.core_type<tc>, window_params = [{transform_indices = @transform_0, window_bounds = array<i64: 1, 64, 256>}, {pipeline_mode = #tpu.pipeline_mode<synchronous>, transform_indices = @transform_1, window_bounds = array<i64: 64, 4>}, {pipeline_mode = #tpu.pipeline_mode<synchronous>, transform_indices = @transform_2, window_bounds = array<i64: 1, 4>}, {transform_indices = @transform_3, window_bounds = array<i64: 1, 1>}, {pipeline_mode = #tpu.pipeline_mode<synchronous>, transform_indices = @transform_4, window_bounds = array<i64: 4, 64>}, {pipeline_mode = #tpu.pipeline_mode<synchronous>, transform_indices = @transform_5, window_bounds = array<i64: 1, 64>}, {transform_indices = @transform_6, window_bounds = array<i64: 1, 64, 256>}]} {
    %c0 = arith.constant 0 : index
    %c0_0 = arith.constant 0 : index
    %c0_1 = arith.constant 0 : index
    %0 = vector.load %arg1[%c0, %c0_0, %c0_1] : memref<1x64x256xf32, #tpu.memory_space<vmem>>, vector<1x64x256xf32>
    %cst = arith.constant dense<0.000000e+00> : vector<1x64xf32>
    %1 = vector.multi_reduction <add>, %0, %cst [2] : vector<1x64x256xf32> to vector<1x64xf32>
    %cst_2 = arith.constant 2.560000e+02 : f32
    %2 = vector.broadcast %cst_2 : f32 to vector<1x64xf32>
    %3 = arith.divf %1, %2 : vector<1x64xf32>
    %c0_3 = arith.constant 0 : index
    %c0_4 = arith.constant 0 : index
    %4 = vector.load %arg2[%c0_3, %c0_4] : memref<64x4xf32, #tpu.memory_space<vmem>>, vector<64x4xf32>
    %cst_5 = arith.constant dense<0.000000e+00> : vector<1x4xf32>
    %5 = tpu.matmul %3, %4, %cst_5 {dimension_numbers = #tpu.dot_dimension_numbers<[1], [0], [0], [1], [0, 0, 1, 1], [], []>} : vector<1x64xf32>, vector<64x4xf32>, vector<1x4xf32> -> vector<1x4xf32>
    %c0_6 = arith.constant 0 : index
    %c0_7 = arith.constant 0 : index
    %6 = vector.load %arg3[%c0_6, %c0_7] : memref<1x4xf32, #tpu.memory_space<vmem>>, vector<1x4xf32>
    %7 = arith.addf %5, %6 : vector<1x4xf32>
    %c0_8 = arith.constant 0 : index
    %c0_9 = arith.constant 0 : index
    %8 = memref.load %arg4[%c0_8, %c0_9] : memref<1x1xf32, #tpu.memory_space<smem>>
    %cst_10 = arith.constant 0.000000e+00 : f32
    %9 = vector.broadcast %cst_10 : f32 to vector<1x4xf32>
    %10 = arith.cmpf oge, %7, %9 : vector<1x4xf32>
    %11 = vector.broadcast %8 : f32 to vector<1x4xf32>
    %12 = arith.mulf %11, %7 : vector<1x4xf32>
    %13 = arith.select %10, %7, %12 : vector<1x4xi1>, vector<1x4xf32>
    %c0_11 = arith.constant 0 : index
    %c0_12 = arith.constant 0 : index
    %14 = vector.load %arg5[%c0_11, %c0_12] : memref<4x64xf32, #tpu.memory_space<vmem>>, vector<4x64xf32>
    %cst_13 = arith.constant dense<0.000000e+00> : vector<1x64xf32>
    %15 = tpu.matmul %13, %14, %cst_13 {dimension_numbers = #tpu.dot_dimension_numbers<[1], [0], [0], [1], [0, 0, 1, 1], [], []>} : vector<1x4xf32>, vector<4x64xf32>, vector<1x64xf32> -> vector<1x64xf32>
    %c0_14 = arith.constant 0 : index
    %c0_15 = arith.constant 0 : index
    %16 = vector.load %arg6[%c0_14, %c0_15] : memref<1x64xf32, #tpu.memory_space<vmem>>, vector<1x64xf32>
    %17 = arith.addf %15, %16 : vector<1x64xf32>
    %18 = arith.negf %17 : vector<1x64xf32>
    %19 = math.exp %18 : vector<1x64xf32>
    %cst_16 = arith.constant 1.000000e+00 : f32
    %20 = vector.broadcast %cst_16 : f32 to vector<1x64xf32>
    %21 = arith.addf %20, %19 : vector<1x64xf32>
    %22 = arith.divf %20, %21 : vector<1x64xf32>
    %23 = vector.shape_cast %22 : vector<1x64xf32> to vector<1x64x1xf32>
    %24 = vector.broadcast %23 : vector<1x64x1xf32> to vector<1x64x256xf32>
    %25 = arith.mulf %0, %24 : vector<1x64x256xf32>
    %c0_17 = arith.constant 0 : index
    %c0_18 = arith.constant 0 : index
    %c0_19 = arith.constant 0 : index
    %26 = vector.load %arg7[%c0_17, %c0_18, %c0_19] : memref<1x64x256xf32, #tpu.memory_space<vmem>>, vector<1x64x256xf32>
    tpu.vector_store %arg7[%c0_17, %c0_18, %c0_19], %25 {strides = array<i32>} : memref<1x64x256xf32, #tpu.memory_space<vmem>>, vector<1x64x256xf32>,
    return
  }
  func.func @transform_0(%arg0: i32) -> (i32, i32, i32) {
    %c0_i32 = arith.constant 0 : i32
    %c0_i32_0 = arith.constant 0 : i32
    %c0_i32_1 = arith.constant 0 : i32
    return %arg0, %c0_i32, %c0_i32_0 : i32, i32, i32
  }
  func.func @transform_1(%arg0: i32) -> (i32, i32) {
    %c0_i32 = arith.constant 0 : i32
    %c0_i32_0 = arith.constant 0 : i32
    %c0_i32_1 = arith.constant 0 : i32
    return %c0_i32, %c0_i32_0 : i32, i32
  }
  func.func @transform_2(%arg0: i32) -> (i32, i32) {
    %c0_i32 = arith.constant 0 : i32
    %c0_i32_0 = arith.constant 0 : i32
    %c0_i32_1 = arith.constant 0 : i32
    return %c0_i32, %c0_i32_0 : i32, i32
  }
  func.func @transform_3(%arg0: i32) -> (i32, i32) {
    %c0_i32 = arith.constant 0 : i32
    %c0_i32_0 = arith.constant 0 : i32
    %c0_i32_1 = arith.constant 0 : i32
    return %c0_i32, %c0_i32_0 : i32, i32
  }
  func.func @transform_4(%arg0: i32) -> (i32, i32) {
    %c0_i32 = arith.constant 0 : i32
    %c0_i32_0 = arith.constant 0 : i32
    %c0_i32_1 = arith.constant 0 : i32
    return %c0_i32, %c0_i32_0 : i32, i32
  }
  func.func @transform_5(%arg0: i32) -> (i32, i32) {
    %c0_i32 = arith.constant 0 : i32
    %c0_i32_0 = arith.constant 0 : i32
    %c0_i32_1 = arith.constant 0 : i32
    return %c0_i32, %c0_i32_0 : i32, i32
  }
  func.func @transform_6(%arg0: i32) -> (i32, i32, i32) {
    %c0_i32 = arith.constant 0 : i32
    %c0_i32_0 = arith.constant 0 : i32
    %c0_i32_1 = arith.constant 0 : i32
    return %arg0, %c0_i32, %c0_i32_0 : i32, i32, i32
  }
}

</mosaic_0001>

<llo_original>
// kernel: tpu_custom_call.1
$region0: #{tpu_custom_call.1}
  #allocation0 [shape = 'u32[]', space=smem, size = 0x4, offset = 0x4, fixed_abs, tag = 'smem constant byte address 0x4 - core index']
  #allocation1 [shape = 'u32[144,128]{1,0:T(1,128)}', space=vmem, size = 0x12000, scoped, tag = 'internal scratch']
  #allocation2 [shape = 'f32[1,1]{1,0:T(1,128)S(6)}', space=smem, size = 0x200, scoped, tag = 'scoped memory for tpu_custom_call.1']
  %s0 = inlined_call_operand.hbm [shape: f32[2,64,256], index: 0, kind: input, shape index: {}]
  %s1 = inlined_call_operand.vmem [shape: f32[64,4], index: 1, kind: input, shape index: {}]
  %s2 = inlined_call_operand.vmem [shape: f32[1,4], index: 2, kind: input, shape index: {}]
  %s3 = inlined_call_operand.<no memory space> [shape: f32[1,1], index: 3, kind: input, shape index: {}]
  %s4 = inlined_call_operand.vmem [shape: f32[4,64], index: 4, kind: input, shape index: {}]
  %s5 = inlined_call_operand.vmem [shape: f32[1,64], index: 5, kind: input, shape index: {}]
  %s6 = inlined_call_operand.hbm [shape: f32[2,64,256], index: 6, kind: output, shape index: {}]
  %s7 = sld [smem:[#allocation0]]
  $region61: #{tpu_custom_call.1} parent=0
    _
  %s9 = ssub.s32 1, %s7
  %s10 = scalar_select 0, %s9, %s7
  %11 = sst [smem:[#allocation2]] %s3
  $region1: #{tpu_custom_call.1} parent=0
    #allocation3 [shape = 'u8[131072]{0}', space=vmem, size = 0x20000, scoped, tag = 'input window, operand 0']
    #allocation4 [shape = 's32[2]{0}', space=sflag, size = 0x8, scoped, tag = 'scoped memory for tpu_custom_call.1']
    #allocation5 [shape = 's32[2]{0}', space=sflag, size = 0x8, scoped, tag = 'scoped memory for tpu_custom_call.1']
    #allocation6 [shape = 'u8[131072]{0}', space=vmem, size = 0x20000, scoped, tag = 'output window, operand 0']
    %12 = vsyncpa [#allocation4], 0
    %s13 = scalar_lea.sflag [#allocation4], 1
    %14 = vsyncpa %s13, 0
    %15 = vsyncpa [#allocation5], 0
    %s16 = scalar_lea.sflag [#allocation5], 1
    %17 = vsyncpa %s16, 0
    loop: start=0, step=1, limit=4
    $region2: #{tpu_custom_call.1} parent=1 // loop_pre_header
      _
    $region3: #{tpu_custom_call.1} parent=1 // loop_header
      %s19 = sphi 0, %s23
      %p20 = scmp.ge.s32.totalorder %s19, 4
      %s29 = sphi 0, %s31
      %s32 = sphi 0, %s29
      %s33 = sphi 0, %s32
      %s49 = sphi 0, %s33
      %s53 = sphi 0, %s53
      %s55 = sphi 0, %s53
      %s56 = sphi 0, %s55
      %s70 = sphi 0, %s56
      %s74 = sphi 0, %s74
      %s76 = sphi 0, %s74
      %s77 = sphi 0, %s76
      %s91 = sphi 0, %s77
      %s95 = sphi 0, %s95
      %s97 = sphi 0, %s95
      %s98 = sphi 0, %s97
      %s112 = sphi 0, %s98
      %s116 = sphi 0, %s116
      %s118 = sphi 0, %s116
      %s119 = sphi 0, %s118
      %s133 = sphi 0, %s119
      %s137 = sphi 0, %s137
      %s139 = sphi 0, %s137
      %s140 = sphi 0, %s139
      %s154 = sphi 0, %s140
      %s160 = sphi 0, %s162
      %s163 = sphi 0, %s160
      %s164 = sphi 0, %s163
      %s180 = sphi 0, %s164
    $region4: #{tpu_custom_call.1} parent=1 // loop_header_branch
      %22 = sbr.rel (%p20) target = $region8
    $region5: #{tpu_custom_call.1} parent=1 // loop_body
      %s24 = ssub.s32 %s19, 1
      %s25 = ssub.s32 %s19, 2
      %s26 = sadd.s32 %s19, 1
      %s27 = ssub.s32 %s19, %s26
      %p28 = scmp.eq.s32.totalorder %s27, 0
      %s30 = sadd.s32 %s29, 1
      %s31 = scalar_select %p28, %s29, %s30
      %p34 = pneg %p28
      %p35 = scmp.eq.s32.totalorder %s19, 1
      %p36 = por %p34, %p35
      %p37 = scmp.ne.s32.totalorder %s29, %s32
      %p38 = scmp.eq.s32.totalorder %s19, 0
      %p39 = por %p37, %p38
      %p40 = scmp.ne.s32.totalorder %s29, %s32
      %p41 = scmp.eq.s32.totalorder %s24, 1
      %p42 = por %p40, %p41
      %p43 = scmp.ne.s32.totalorder %s32, %s33
      %p44 = scmp.eq.s32.totalorder %s24, 0
      %p45 = por %p43, %p44
      %p46 = scmp.ne.s32.totalorder %s32, %s33
      %p47 = scmp.eq.s32.totalorder %s25, 1
      %p48 = por %p46, %p47
      %p50 = scmp.ne.s32.totalorder %s33, %s49
      %p51 = scmp.eq.s32.totalorder %s25, 0
      %p52 = por %p50, %p51
      %s54 = sadd.s32 %s53, 1
      %p57 = scmp.eq.s32.totalorder %s19, 1
      %p58 = scmp.ne.s32.totalorder %s53, %s55
      %p59 = scmp.eq.s32.totalorder %s19, 0
      %p60 = por %p58, %p59
      %p61 = scmp.ne.s32.totalorder %s53, %s55
      %p62 = scmp.eq.s32.totalorder %s24, 1
      %p63 = por %p61, %p62
      %p64 = scmp.ne.s32.totalorder %s55, %s56
      %p65 = scmp.eq.s32.totalorder %s24, 0
      %p66 = por %p64, %p65
      %p67 = scmp.ne.s32.totalorder %s55, %s56
      %p68 = scmp.eq.s32.totalorder %s25, 1
      %p69 = por %p67, %p68
      %p71 = scmp.ne.s32.totalorder %s56, %s70
      %p72 = scmp.eq.s32.totalorder %s25, 0
      %p73 = por %p71, %p72
      %s75 = sadd.s32 %s74, 1
      %p78 = scmp.eq.s32.totalorder %s19, 1
      %p79 = scmp.ne.s32.totalorder %s74, %s76
      %p80 = scmp.eq.s32.totalorder %s19, 0
      %p81 = por %p79, %p80
      %p82 = scmp.ne.s32.totalorder %s74, %s76
      %p83 = scmp.eq.s32.totalorder %s24, 1
      %p84 = por %p82, %p83
      %p85 = scmp.ne.s32.totalorder %s76, %s77
      %p86 = scmp.eq.s32.totalorder %s24, 0
      %p87 = por %p85, %p86
      %p88 = scmp.ne.s32.totalorder %s76, %s77
      %p89 = scmp.eq.s32.totalorder %s25, 1
      %p90 = por %p88, %p89
      %p92 = scmp.ne.s32.totalorder %s77, %s91
      %p93 = scmp.eq.s32.totalorder %s25, 0
      %p94 = por %p92, %p93
      %s96 = sadd.s32 %s95, 1
      %p99 = scmp.eq.s32.totalorder %s19, 1
      %p100 = scmp.ne.s32.totalorder %s95, %s97
      %p101 = scmp.eq.s32.totalorder %s19, 0
      %p102 = por %p100, %p101
      %p103 = scmp.ne.s32.totalorder %s95, %s97
      %p104 = scmp.eq.s32.totalorder %s24, 1
      %p105 = por %p103, %p104
      %p106 = scmp.ne.s32.totalorder %s97, %s98
      %p107 = scmp.eq.s32.totalorder %s24, 0
      %p108 = por %p106, %p107
      %p109 = scmp.ne.s32.totalorder %s97, %s98
      %p110 = scmp.eq.s32.totalorder %s25, 1
      %p111 = por %p109, %p110
      %p113 = scmp.ne.s32.totalorder %s98, %s112
      %p114 = scmp.eq.s32.totalorder %s25, 0
      %p115 = por %p113, %p114
      %s117 = sadd.s32 %s116, 1
      %p120 = scmp.eq.s32.totalorder %s19, 1
      %p121 = scmp.ne.s32.totalorder %s116, %s118
      %p122 = scmp.eq.s32.totalorder %s19, 0
      %p123 = por %p121, %p122
      %p124 = scmp.ne.s32.totalorder %s116, %s118
      %p125 = scmp.eq.s32.totalorder %s24, 1
      %p126 = por %p124, %p125
      %p127 = scmp.ne.s32.totalorder %s118, %s119
      %p128 = scmp.eq.s32.totalorder %s24, 0
      %p129 = por %p127, %p128
      %p130 = scmp.ne.s32.totalorder %s118, %s119
      %p131 = scmp.eq.s32.totalorder %s25, 1
      %p132 = por %p130, %p131
      %p134 = scmp.ne.s32.totalorder %s119, %s133
      %p135 = scmp.eq.s32.totalorder %s25, 0
      %p136 = por %p134, %p135
      %s138 = sadd.s32 %s137, 1
      %p141 = scmp.eq.s32.totalorder %s19, 1
      %p142 = scmp.ne.s32.totalorder %s137, %s139
      %p143 = scmp.eq.s32.totalorder %s19, 0
      %p144 = por %p142, %p143
      %p145 = scmp.ne.s32.totalorder %s137, %s139
      %p146 = scmp.eq.s32.totalorder %s24, 1
      %p147 = por %p145, %p146
      %p148 = scmp.ne.s32.totalorder %s139, %s140
      %p149 = scmp.eq.s32.totalorder %s24, 0
      %p150 = por %p148, %p149
      %p151 = scmp.ne.s32.totalorder %s139, %s140
      %p152 = scmp.eq.s32.totalorder %s25, 1
      %p153 = por %p151, %p152
      %p155 = scmp.ne.s32.totalorder %s140, %s154
      %p156 = scmp.eq.s32.totalorder %s25, 0
      %p157 = por %p155, %p156
      %s158 = ssub.s32 %s19, %s26
      %p159 = scmp.eq.s32.totalorder %s158, 0
      %s161 = sadd.s32 %s160, 1
      %s162 = scalar_select %p159, %s160, %s161
      %p165 = pneg %p159
      %p166 = scmp.eq.s32.totalorder %s19, 1
      %p167 = por %p165, %p166
      %p168 = scmp.ne.s32.totalorder %s160, %s163
      %p169 = scmp.eq.s32.totalorder %s19, 0
      %p170 = por %p168, %p169
      %p171 = scmp.ne.s32.totalorder %s160, %s163
      %p172 = scmp.eq.s32.totalorder %s24, 1
      %p173 = por %p171, %p172
      %p174 = scmp.ne.s32.totalorder %s163, %s164
      %p175 = scmp.eq.s32.totalorder %s24, 0
      %p176 = por %p174, %p175
      %p177 = scmp.ne.s32.totalorder %s163, %s164
      %p178 = scmp.eq.s32.totalorder %s25, 1
      %p179 = por %p177, %p178
      %p181 = scmp.ne.s32.totalorder %s164, %s180
      %p182 = scmp.eq.s32.totalorder %s25, 0
      %p183 = por %p181, %p182
      %p184 = scmp.le.s32.totalorder 1, %s19
      %p185 = scmp.lt.s32.totalorder %s19, 3
      %p186 = pnand %p184, %p185
      %p187 = pneg %p186
      // Predicated region
      $region9: #{tpu_custom_call.1} parent=5 // pred_check
        _
      $region10: #{tpu_custom_call.1} parent=5 // pred_check_branch
        %189 = sbr.rel (%p186) target = $region12
      $region11: #{tpu_custom_call.1} parent=5 // pred_region
        %s190 = ssub.s32 %s19, 1
        // Predicated region
        $region13: #{tpu_custom_call.1} parent=11 // pred_check
          %p191 = pneg %p66
        $region14: #{tpu_custom_call.1} parent=11 // pred_check_branch
          %193 = sbr.rel (%p191) target = $region16
        $region15: #{tpu_custom_call.1} parent=11 // pred_region
          _
        $region16: #{tpu_custom_call.1} parent=11 // pred_fallthru
          _
        // Predicated region
        $region17: #{tpu_custom_call.1} parent=11 // pred_check
          %p194 = pneg %p87
        $region18: #{tpu_custom_call.1} parent=11 // pred_check_branch
          %196 = sbr.rel (%p194) target = $region20
        $region19: #{tpu_custom_call.1} parent=11 // pred_region
          _
        $region20: #{tpu_custom_call.1} parent=11 // pred_fallthru
          _
        // Predicated region
        $region21: #{tpu_custom_call.1} parent=11 // pred_check
          %p197 = pneg %p108
        $region22: #{tpu_custom_call.1} parent=11 // pred_check_branch
          %199 = sbr.rel (%p197) target = $region24
        $region23: #{tpu_custom_call.1} parent=11 // pred_region
          _
        $region24: #{tpu_custom_call.1} parent=11 // pred_fallthru
          _
        // Predicated region
        $region25: #{tpu_custom_call.1} parent=11 // pred_check
          %p200 = pneg %p129
        $region26: #{tpu_custom_call.1} parent=11 // pred_check_branch
          %202 = sbr.rel (%p200) target = $region28
        $region27: #{tpu_custom_call.1} parent=11 // pred_region
          _
        $region28: #{tpu_custom_call.1} parent=11 // pred_fallthru
          _
        // Predicated region
        $region29: #{tpu_custom_call.1} parent=11 // pred_check
          %p203 = pneg %p150
        $region30: #{tpu_custom_call.1} parent=11 // pred_check_branch
          %205 = sbr.rel (%p203) target = $region32
        $region31: #{tpu_custom_call.1} parent=11 // pred_region
          _
        $region32: #{tpu_custom_call.1} parent=11 // pred_fallthru
          _
      $region12: #{tpu_custom_call.1} parent=5 // pred_fallthru
        _
      %p206 = scmp.lt.s32.totalorder %s19, 2
      // Predicated region
      $region33: #{tpu_custom_call.1} parent=5 // pred_check
        %p207 = pneg %p206
      $region34: #{tpu_custom_call.1} parent=5 // pred_check_branch
        %209 = sbr.rel (%p207) target = $region36
      $region35: #{tpu_custom_call.1} parent=5 // pred_region
        // Predicated region
        $region37: #{tpu_custom_call.1} parent=35 // pred_check
          %p210 = pneg %p39
        $region38: #{tpu_custom_call.1} parent=35 // pred_check_branch
          %212 = sbr.rel (%p210) target = $region40
        $region39: #{tpu_custom_call.1} parent=35 // pred_region
          %s213 = sand.u32 %s29, 1
          %s214 = scalar_lea.sflag [#allocation4], %s213
          %s215 = sand.u32 %s29, 1
          %s216 = smul.addr %s215, 128
          %s217 = scalar_lea.vmem [#allocation3], %s216
          %s219 = ssub.s32 2048, 2048
          %220 = vsyncadd %s214, %s219
          %s221 = smul.addr %s19, 16
          %s222 = smul.addr %s221, 128
          %s223 = scalar_lea.hbm %s0, %s222
          %s224 = sshll.u32 %s217, 4
          %s225 = int_to_ptr.vmem [resolvable:$true] %s224
          %230 = dma.hbm_to_vmem [thread:$0]  %s223, 2048, %s225, %s214, 256, 256, 16
        $region40: #{tpu_custom_call.1} parent=35 // pred_fallthru
          _
      $region36: #{tpu_custom_call.1} parent=5 // pred_fallthru
        _
      %p231 = scmp.le.s32.totalorder 1, %s19
      %p232 = scmp.lt.s32.totalorder %s19, 3
      %p233 = pnand %p231, %p232
      %p234 = pneg %p233
      // Predicated region
      $region41: #{tpu_custom_call.1} parent=5 // pred_check
        _
      $region42: #{tpu_custom_call.1} parent=5 // pred_check_branch
        %236 = sbr.rel (%p233) target = $region44
      $region43: #{tpu_custom_call.1} parent=5 // pred_region
        %s237 = ssub.s32 %s19, 1
        %s238 = sand.u32 %s32, 1
        %s239 = scalar_lea.sflag [#allocation4], %s238
        %s240 = sand.u32 %s32, 1
        %s241 = smul.addr %s240, 128
        %s242 = scalar_lea.vmem [#allocation3], %s241
        // Predicated region
        $region45: #{tpu_custom_call.1} parent=43 // pred_check
          %p243 = pneg %p45
        $region46: #{tpu_custom_call.1} parent=43 // pred_check_branch
          %245 = sbr.rel (%p243) target = $region48
        $region47: #{tpu_custom_call.1} parent=43 // pred_region
          %246 = dma.done %s239, 2048
        $region48: #{tpu_custom_call.1} parent=43 // pred_fallthru
          _
        %s247 = sand.u32 %s32, 1
        %s248 = scalar_lea.sflag [#allocation4], %s247
        %s249 = sand.u32 %s32, 1
        %s250 = smul.addr %s249, 128
        %s251 = scalar_lea.vmem [#allocation3], %s250
        %p252 = pneg %p45
        %p253 = pneg %p42
        %p254 = pneg %p66
        %p255 = pneg %p63
        %p256 = pneg %p87
        %p257 = pneg %p84
        %p258 = pneg %p108
        %p259 = pneg %p105
        %p260 = pneg %p129
        %p261 = pneg %p126
        %p262 = pneg %p150
        %p263 = pneg %p147
        %p264 = pneg %p176
        %p265 = pneg %p173
        %s266 = sand.u32 %s163, 1
        %s267 = scalar_lea.sflag [#allocation5], %s266
        %s268 = sand.u32 %s163, 1
        %s269 = smul.addr %s268, 128
        %s270 = scalar_lea.vmem [#allocation6], %s269
        %v271 = vld [vmem:[%s242] sm:$0xff]
        %v272 = vld [vmem:[%s242 + $0x8] sm:$0xff]
        %v273 = vld [vmem:[%s242 + $0x10] sm:$0xff]
        %v274 = vld [vmem:[%s242 + $0x18] sm:$0xff]
        %v275 = vld [vmem:[%s242 + $0x20] sm:$0xff]
        %v276 = vld [vmem:[%s242 + $0x28] sm:$0xff]
        %v277 = vld [vmem:[%s242 + $0x30] sm:$0xff]
        %v278 = vld [vmem:[%s242 + $0x38] sm:$0xff]
        %v279 = vld [vmem:[%s242 + $0x40] sm:$0xff]
        %v280 = vld [vmem:[%s242 + $0x48] sm:$0xff]
        %v281 = vld [vmem:[%s242 + $0x50] sm:$0xff]
        %v282 = vld [vmem:[%s242 + $0x58] sm:$0xff]
        %v283 = vld [vmem:[%s242 + $0x60] sm:$0xff]
        %v284 = vld [vmem:[%s242 + $0x68] sm:$0xff]
        %v285 = vld [vmem:[%s242 + $0x70] sm:$0xff]
        %v286 = vld [vmem:[%s242 + $0x78] sm:$0xff]
        %v287 = vadd.f32 %v271, %v272
        %288 = vadd.xlane.f32.xlu0 %v287
        %v289 = vpop.xlane.xlu0 %288
        %v290 = vadd.f32 %v273, %v274
        %291 = vadd.xlane.f32.xlu0 %v290
        %v292 = vpop.xlane.xlu0 %291
        %v293 = vadd.f32 %v275, %v276
        %294 = vadd.xlane.f32.xlu0 %v293
        %v295 = vpop.xlane.xlu0 %294
        %v296 = vadd.f32 %v277, %v278
        %297 = vadd.xlane.f32.xlu0 %v296
        %v298 = vpop.xlane.xlu0 %297
        %v299 = vadd.f32 %v279, %v280
        %300 = vadd.xlane.f32.xlu0 %v299
        %v301 = vpop.xlane.xlu0 %300
        %v302 = vadd.f32 %v281, %v282
        %303 = vadd.xlane.f32.xlu0 %v302
        %v304 = vpop.xlane.xlu0 %303
        %v305 = vadd.f32 %v283, %v284
        %306 = vadd.xlane.f32.xlu0 %v305
        %v307 = vpop.xlane.xlu0 %306
        %v308 = vadd.f32 %v285, %v286
        %309 = vadd.xlane.f32.xlu0 %v308
        %v310 = vpop.xlane.xlu0 %309
        %v311 = vrcp.pop 256.0
        %v312 = vmul.f32 %v289, %v311
        %v313 = vmul.f32 %v292, %v311
        %v314 = vmul.f32 %v295, %v311
        %v315 = vmul.f32 %v298, %v311
        %v316 = vmul.f32 %v301, %v311
        %v317 = vmul.f32 %v304, %v311
        %v318 = vmul.f32 %v307, %v311
        %v319 = vmul.f32 %v310, %v311
        %v320 = vld [vmem:[%s1] sm:$0xff]
        %v321 = vld [vmem:[%s1 + $0x8] sm:$0xff]
        %v322 = vld [vmem:[%s1 + $0x10] sm:$0xff]
        %v323 = vld [vmem:[%s1 + $0x18] sm:$0xff]
        %v324 = vld [vmem:[%s1 + $0x20] sm:$0xff]
        %v325 = vld [vmem:[%s1 + $0x28] sm:$0xff]
        %v326 = vld [vmem:[%s1 + $0x30] sm:$0xff]
        %v327 = vld [vmem:[%s1 + $0x38] sm:$0xff]
        %v328 = vld [vmem:[%s2] sm:$0x1]
        %v337 = vlaneseq
        %v338 = vand.u32 %v337, 127
        %v339 = vlaneseq
        %v340 = vshrl.u32 %v339, 7
        %v341 = vsub.s32 %v338, %v340
        %v342 = vrot.slane %v312, %v341
        %v343 = vadd.s32 %v338, 4294967288
        %v344 = vlaneseq
        %v345 = vshrl.u32 %v344, 7
        %v346 = vsub.s32 %v343, %v345
        %v347 = vrot.slane %v313, %v346
        %vm348 = vcmask 130112
        %v349 = vsel %vm348, %v347, %v342
        %v350 = vadd.s32 %v338, 4294967280
        %v351 = vlaneseq
        %v352 = vshrl.u32 %v351, 7
        %v353 = vsub.s32 %v350, %v352
        %v354 = vrot.slane %v314, %v353
        %vm355 = vcmask 195712
        %v356 = vsel %vm355, %v354, %v349
        %v357 = vadd.s32 %v338, 4294967272
        %v358 = vlaneseq
        %v359 = vshrl.u32 %v358, 7
        %v360 = vsub.s32 %v357, %v359
        %v361 = vrot.slane %v315, %v360
        %vm362 = vcmask 261312
        %v363 = vsel %vm362, %v361, %v356
        %v364 = vadd.s32 %v338, 4294967264
        %v365 = vlaneseq
        %v366 = vshrl.u32 %v365, 7
        %v367 = vsub.s32 %v364, %v366
        %v368 = vrot.slane %v316, %v367
        %vm369 = vcmask 326912
        %v370 = vsel %vm369, %v368, %v363
        %v371 = vadd.s32 %v338, 4294967256
        %v372 = vlaneseq
        %v373 = vshrl.u32 %v372, 7
        %v374 = vsub.s32 %v371, %v373
        %v375 = vrot.slane %v317, %v374
        %vm376 = vcmask 392512
        %v377 = vsel %vm376, %v375, %v370
        %v378 = vadd.s32 %v338, 4294967248
        %v379 = vlaneseq
        %v380 = vshrl.u32 %v379, 7
        %v381 = vsub.s32 %v378, %v380
        %v382 = vrot.slane %v318, %v381
        %vm383 = vcmask 458112
        %v384 = vsel %vm383, %v382, %v377
        %v385 = vadd.s32 %v338, 4294967240
        %v386 = vlaneseq
        %v387 = vshrl.u32 %v386, 7
        %v388 = vsub.s32 %v385, %v387
        %v389 = vrot.slane %v319, %v388
        %vm390 = vcmask 523712
        %v391 = vsel %vm390, %v389, %v384
        %vm392 = vcmask 523264
        %v393 = vsel %vm392, %v391, 0
        %395 = vmatprep.subr.mxu0 0.0
        %396 = vmatpush1.msra.mxu0 0.0
        %397 = vmatprep.subr.mxu0 0.0
        %398 = vmatpush1.msra.mxu0 0.0
        %399 = vmatprep.subr.mxu0 0.0
        %400 = vmatpush1.msra.mxu0 0.0
        %401 = vmatprep.subr.mxu0 0.0
        %402 = vmatpush1.msra.mxu0 0.0
        %403 = vmatprep.subr.mxu0 0.0
        %404 = vmatpush1.msra.mxu0 0.0
        %405 = vmatprep.subr.mxu0 0.0
        %406 = vmatpush1.msra.mxu0 0.0
        %407 = vmatprep.subr.mxu0 0.0
        %408 = vmatpush1.msra.mxu0 0.0
        %409 = vmatprep.subr.mxu0 0.0
        %410 = vmatpush1.msra.mxu0 0.0
        %411 = vmatprep.subr.mxu0 0.0
        %412 = vmatpush1.msra.mxu0 %v327
        %413 = vmatprep.subr.mxu0 0.0
        %414 = vmatpush1.msra.mxu0 %v326
        %415 = vmatprep.subr.mxu0 0.0
        %416 = vmatpush1.msra.mxu0 %v325
        %417 = vmatprep.subr.mxu0 0.0
        %418 = vmatpush1.msra.mxu0 %v324
        %419 = vmatprep.subr.mxu0 0.0
        %420 = vmatpush1.msra.mxu0 %v323
        %421 = vmatprep.subr.mxu0 0.0
        %422 = vmatpush1.msra.mxu0 %v322
        %423 = vmatprep.subr.mxu0 0.0
        %424 = vmatpush1.msra.mxu0 %v321
        %425 = vmatprep.subr.mxu0 0.0
        %426 = vmatpush1.msra.mxu0 %v320
        %427 = vmatprep.subr.mxu0 0.0
        %428 = vmatpush2.msra.mxu0 0.0
        %429 = vmatprep.subr.mxu0 0.0
        %430 = vmatpush2.msra.mxu0 0.0
        %431 = vmatprep.subr.mxu0 0.0
        %432 = vmatpush2.msra.mxu0 0.0
        %433 = vmatprep.subr.mxu0 0.0
        %434 = vmatpush2.msra.mxu0 0.0
        %435 = vmatprep.subr.mxu0 0.0
        %436 = vmatpush2.msra.mxu0 0.0
        %437 = vmatprep.subr.mxu0 0.0
        %438 = vmatpush2.msra.mxu0 0.0
        %439 = vmatprep.subr.mxu0 0.0
        %440 = vmatpush2.msra.mxu0 0.0
        %441 = vmatprep.subr.mxu0 0.0
        %442 = vmatpush2.msra.mxu0 0.0
        %443 = vmatprep.subr.mxu0 0.0
        %444 = vmatpush2.msra.mxu0 0.0
        %445 = vmatprep.subr.mxu0 0.0
        %446 = vmatpush2.msra.mxu0 0.0
        %447 = vmatprep.subr.mxu0 0.0
        %448 = vmatpush2.msra.mxu0 0.0
        %449 = vmatprep.subr.mxu0 0.0
        %450 = vmatpush2.msra.mxu0 0.0
        %451 = vmatprep.subr.mxu0 0.0
        %452 = vmatpush2.msra.mxu0 0.0
        %453 = vmatprep.subr.mxu0 0.0
        %454 = vmatpush2.msra.mxu0 0.0
        %455 = vmatprep.subr.mxu0 0.0
        %456 = vmatpush2.msra.mxu0 0.0
        %457 = vmatprep.subr.mxu0 0.0
        %458 = vmatpush2.msra.mxu0 0.0
        %459 = vmatprep.mubr.f32.mxu0 0.0
        %460 = vmatmul.mubr.f32.gmra.mxu0 %v393
        %v461 = vpop.f32.mrf.mxu0
        %v462 = vadd.f32 %v328, %v461
        %v463 = vpop.f32.mrf.mxu0
        %464 = vdwg.mxu0
        %s465 = sld [smem:[#allocation2]]
        %vm466 = vcmp.ge.f32.partialorder %v462, 0.0
        %v467 = vstv %s465
        %v468 = vmul.f32 %v467, %v462
        %v469 = vsel %vm466, %v462, %v468
        %v470 = vld [vmem:[%s4] sm:$0xf]
        %v471 = vld [vmem:[%s5] sm:$0x1]
        %vm472 = vcmask 31744
        %v474 = vsel %vm472, %v469, 0
        %vm476 = vcmask 1043456
        %v478 = vsel %vm476, %v470, 0
        %480 = vmatprep.subr.mxu0 0.0
        %481 = vmatpush1.msra.mxu0 0.0
        %482 = vmatprep.subr.mxu0 0.0
        %483 = vmatpush1.msra.mxu0 0.0
        %484 = vmatprep.subr.mxu0 0.0
        %485 = vmatpush1.msra.mxu0 0.0
        %486 = vmatprep.subr.mxu0 0.0
        %487 = vmatpush1.msra.mxu0 0.0
        %488 = vmatprep.subr.mxu0 0.0
        %489 = vmatpush1.msra.mxu0 0.0
        %490 = vmatprep.subr.mxu0 0.0
        %491 = vmatpush1.msra.mxu0 0.0
        %492 = vmatprep.subr.mxu0 0.0
        %493 = vmatpush1.msra.mxu0 0.0
        %494 = vmatprep.subr.mxu0 0.0
        %495 = vmatpush1.msra.mxu0 0.0
        %496 = vmatprep.subr.mxu0 0.0
        %497 = vmatpush1.msra.mxu0 0.0
        %498 = vmatprep.subr.mxu0 0.0
        %499 = vmatpush1.msra.mxu0 0.0
        %500 = vmatprep.subr.mxu0 0.0
        %501 = vmatpush1.msra.mxu0 0.0
        %502 = vmatprep.subr.mxu0 0.0
        %503 = vmatpush1.msra.mxu0 0.0
        %504 = vmatprep.subr.mxu0 0.0
        %505 = vmatpush1.msra.mxu0 0.0
        %506 = vmatprep.subr.mxu0 0.0
        %507 = vmatpush1.msra.mxu0 0.0
        %508 = vmatprep.subr.mxu0 0.0
        %509 = vmatpush1.msra.mxu0 0.0
        %510 = vmatprep.subr.mxu0 0.0
        %511 = vmatpush1.msra.mxu0 %v478
        %512 = vmatprep.subr.mxu0 0.0
        %513 = vmatpush2.msra.mxu0 0.0
        %514 = vmatprep.subr.mxu0 0.0
        %515 = vmatpush2.msra.mxu0 0.0
        %516 = vmatprep.subr.mxu0 0.0
        %517 = vmatpush2.msra.mxu0 0.0
        %518 = vmatprep.subr.mxu0 0.0
        %519 = vmatpush2.msra.mxu0 0.0
        %520 = vmatprep.subr.mxu0 0.0
        %521 = vmatpush2.msra.mxu0 0.0
        %522 = vmatprep.subr.mxu0 0.0
        %523 = vmatpush2.msra.mxu0 0.0
        %524 = vmatprep.subr.mxu0 0.0
        %525 = vmatpush2.msra.mxu0 0.0
        %526 = vmatprep.subr.mxu0 0.0
        %527 = vmatpush2.msra.mxu0 0.0
        %528 = vmatprep.subr.mxu0 0.0
        %529 = vmatpush2.msra.mxu0 0.0
        %530 = vmatprep.subr.mxu0 0.0
        %531 = vmatpush2.msra.mxu0 0.0
        %532 = vmatprep.subr.mxu0 0.0
        %533 = vmatpush2.msra.mxu0 0.0
        %534 = vmatprep.subr.mxu0 0.0
        %535 = vmatpush2.msra.mxu0 0.0
        %536 = vmatprep.subr.mxu0 0.0
        %537 = vmatpush2.msra.mxu0 0.0
        %538 = vmatprep.subr.mxu0 0.0
        %539 = vmatpush2.msra.mxu0 0.0
        %540 = vmatprep.subr.mxu0 0.0
        %541 = vmatpush2.msra.mxu0 0.0
        %542 = vmatprep.subr.mxu0 0.0
        %543 = vmatpush2.msra.mxu0 0.0
        %544 = vmatprep.mubr.f32.mxu0 0.0
        %545 = vmatmul.mubr.f32.gmra.mxu0 %v474
        %v546 = vpop.f32.mrf.mxu0
        %v547 = vadd.f32 %v471, %v546
        %v548 = vpop.f32.mrf.mxu0
        %549 = vdwg.mxu0
        %v550 = vxor.u32 %v547, 2147483648
        %v551 = vmul.f32 %v550, 1.442695
        %v552 = vpow.pop %v551
        %v553 = vadd.f32 %v552, 1.0
        %v554 = vrcp.pop %v553
        %v555 = vmul.f32 1.0, %v554
        %v556 = vlaneseq
        %v557 = vshrl.u32 %v556, 7
        %v558 = vsub.s32 0, %v557
        %v559 = vrot.slane %v555, %v558
        %561 = vbcast.lane.b32.xlu0 %v559, 256
        %v562 = vpop.permute.xlu0 %561
        %s564 = sor.u32 256, 8
        %565 = vbcast.lane.b32.xlu0 %v559, %s564
        %v566 = vpop.permute.xlu0 %565
        %s568 = sor.u32 256, 16
        %569 = vbcast.lane.b32.xlu0 %v559, %s568
        %v570 = vpop.permute.xlu0 %569
        %s572 = sor.u32 256, 24
        %573 = vbcast.lane.b32.xlu0 %v559, %s572
        %v574 = vpop.permute.xlu0 %573
        %s576 = sor.u32 256, 32
        %577 = vbcast.lane.b32.xlu0 %v559, %s576
        %v578 = vpop.permute.xlu0 %577
        %s580 = sor.u32 256, 40
        %581 = vbcast.lane.b32.xlu0 %v559, %s580
        %v582 = vpop.permute.xlu0 %581
        %s584 = sor.u32 256, 48
        %585 = vbcast.lane.b32.xlu0 %v559, %s584
        %v586 = vpop.permute.xlu0 %585
        %s588 = sor.u32 256, 56
        %589 = vbcast.lane.b32.xlu0 %v559, %s588
        %v590 = vpop.permute.xlu0 %589
        %v591 = vmul.f32 %v271, %v562
        %v592 = vmul.f32 %v272, %v562
        %v593 = vmul.f32 %v273, %v566
        %v594 = vmul.f32 %v274, %v566
        %v595 = vmul.f32 %v275, %v570
        %v596 = vmul.f32 %v276, %v570
        %v597 = vmul.f32 %v277, %v574
        %v598 = vmul.f32 %v278, %v574
        %v599 = vmul.f32 %v279, %v578
        %v600 = vmul.f32 %v280, %v578
        %v601 = vmul.f32 %v281, %v582
        %v602 = vmul.f32 %v282, %v582
        %v603 = vmul.f32 %v283, %v586
        %v604 = vmul.f32 %v284, %v586
        %v605 = vmul.f32 %v285, %v590
        %v606 = vmul.f32 %v286, %v590
        %607 = vst [vmem:[%s270] sm:$0xff] %v591
        %608 = vst [vmem:[%s270 + $0x8] sm:$0xff] %v592
        %609 = vst [vmem:[%s270 + $0x10] sm:$0xff] %v593
        %610 = vst [vmem:[%s270 + $0x18] sm:$0xff] %v594
        %611 = vst [vmem:[%s270 + $0x20] sm:$0xff] %v595
        %612 = vst [vmem:[%s270 + $0x28] sm:$0xff] %v596
        %613 = vst [vmem:[%s270 + $0x30] sm:$0xff] %v597
        %614 = vst [vmem:[%s270 + $0x38] sm:$0xff] %v598
        %615 = vst [vmem:[%s270 + $0x40] sm:$0xff] %v599
        %616 = vst [vmem:[%s270 + $0x48] sm:$0xff] %v600
        %617 = vst [vmem:[%s270 + $0x50] sm:$0xff] %v601
        %618 = vst [vmem:[%s270 + $0x58] sm:$0xff] %v602
        %619 = vst [vmem:[%s270 + $0x60] sm:$0xff] %v603
        %620 = vst [vmem:[%s270 + $0x68] sm:$0xff] %v604
        %621 = vst [vmem:[%s270 + $0x70] sm:$0xff] %v605
        %622 = vst [vmem:[%s270 + $0x78] sm:$0xff] %v606
        %s623 = sand.u32 %s163, 1
        %s624 = scalar_lea.sflag [#allocation5], %s623
        %s625 = sand.u32 %s163, 1
        %s626 = smul.addr %s625, 128
        %s627 = scalar_lea.vmem [#allocation6], %s626
        // Predicated region
        $region49: #{tpu_custom_call.1} parent=43 // pred_check
          %p628 = pneg %p173
        $region50: #{tpu_custom_call.1} parent=43 // pred_check_branch
          %630 = sbr.rel (%p628) target = $region52
        $region51: #{tpu_custom_call.1} parent=43 // pred_region
          %s632 = ssub.s32 2048, 2048
          %633 = vsyncadd %s624, %s632
          %s634 = smul.addr %s24, 16
          %s635 = smul.addr %s634, 128
          %s636 = scalar_lea.hbm %s6, %s635
          %s637 = sshll.u32 %s627, 4
          %s638 = int_to_ptr.vmem [resolvable:$true] %s637
          %643 = dma.vmem_to_hbm [thread:$0]  %s638, 2048, %s636, %s624, 256, 256, 16
        $region52: #{tpu_custom_call.1} parent=43 // pred_fallthru
          _
      $region44: #{tpu_custom_call.1} parent=5 // pred_fallthru
        _
      %p644 = scmp.le.s32.totalorder 2, %s19
      // Predicated region
      $region53: #{tpu_custom_call.1} parent=5 // pred_check
        %p645 = pneg %p644
      $region54: #{tpu_custom_call.1} parent=5 // pred_check_branch
        %647 = sbr.rel (%p645) target = $region56
      $region55: #{tpu_custom_call.1} parent=5 // pred_region
        %s648 = ssub.s32 %s19, 2
        // Predicated region
        $region57: #{tpu_custom_call.1} parent=55 // pred_check
          %p649 = pneg %p179
        $region58: #{tpu_custom_call.1} parent=55 // pred_check_branch
          %651 = sbr.rel (%p649) target = $region60
        $region59: #{tpu_custom_call.1} parent=55 // pred_region
          %s652 = sand.u32 %s164, 1
          %s653 = scalar_lea.sflag [#allocation5], %s652
          %s654 = sand.u32 %s164, 1
          %s655 = smul.addr %s654, 128
          %s656 = scalar_lea.vmem [#allocation6], %s655
          %657 = dma.done %s653, 2048
        $region60: #{tpu_custom_call.1} parent=55 // pred_fallthru
          _
      $region56: #{tpu_custom_call.1} parent=5 // pred_fallthru
        _
    $region6: #{tpu_custom_call.1} parent=1 // loop_footer
      %s23 = sadd.s32 1, %s19
    $region7: #{tpu_custom_call.1} parent=1 // loop_footer_branch
      %18 = sbr.rel target = $region3
    $region8: #{tpu_custom_call.1} parent=1 // loop_exit
      _
    %658 = vsyncpa [#allocation4], 1
    %s659 = scalar_lea.sflag [#allocation4], 1
    %660 = vsyncpa %s659, 1
    %661 = vsyncpa [#allocation5], 1
    %s662 = scalar_lea.sflag [#allocation5], 1
    %663 = vsyncpa %s662, 1

</llo_original>
